<compile_context>
chip_gen: v6e
topology: v6e:2x2x1
jax: 0.10.0
libtpu: 0.0.40
codegen_flags: <defaults>
</compile_context>

<pallas_src>
import functools

import jax
import jax.numpy as jnp
import numpy as np
from jax.experimental import pallas as pl
from jax.experimental.pallas import tpu as pltpu


def _round_up(x, m):
    return (x + m - 1) // m * m


def _vmem_capacity_bytes():
    """Physical VMEM per core (generation-aware), with a safe fallback."""
    try:
        info = pltpu.get_tpu_info()
        cap = getattr(info, "vmem_capacity_bytes", None)
        if cap:
            return int(cap)
    except Exception:
        pass
    return 64 << 20  # conservative: v7x per-TensorCore VMEM


def _npn_linear_kernel(xm_ref, xc_ref, wm_ref, wc_ref, bm_ref, bs_ref,
                       om_ref, os_ref):
    """Per-tile body: two MXU matmuls accumulated over the K grid axis.

    All weight-sized elementwise work (softplus, squaring, K-stacking,
    padding) is hoisted to the wrapper, so this is pure MXU + bias add."""
    k = pl.program_id(2)

    om_part = jnp.dot(xm_ref[...], wm_ref[...],
                      preferred_element_type=jnp.float32)
    os_part = jnp.dot(xc_ref[...], wc_ref[...],
                      preferred_element_type=jnp.float32)

    @pl.when(k == 0)
    def _init():
        om_ref[...] = bm_ref[...] + om_part
        os_ref[...] = bs_ref[...] + os_part

    @pl.when(k != 0)
    def _accum():
        om_ref[...] = om_ref[...] + om_part
        os_ref[...] = os_ref[...] + os_part


@functools.partial(
    jax.jit, static_argnames=("tile_b", "tile_n", "tile_k", "matmul_dtype"))
def gaussian_npn_linear(x_m, x_s, W_m, M_s, b_m, p_s, *,
                        tile_b=256, tile_n=512, tile_k=None,
                        matmul_dtype=None):
    if x_s is None:  # module allows a plain tensor input (zero variance)
        x_s = jnp.zeros_like(x_m)

    B, Fin = x_m.shape
    Fout = W_m.shape[1]

    mm_dt = jnp.float32 if matmul_dtype is None else jnp.dtype(matmul_dtype)
    mm_sz = jnp.dtype(mm_dt).itemsize

    # ---- one-time (hoisted) transforms, all in f32 ----
    W_m32 = W_m.astype(jnp.float32)
    W_s = jax.nn.softplus(M_s.astype(jnp.float32))
    b_s = jax.nn.softplus(p_s.astype(jnp.float32))
    A = W_s + W_m32 * W_m32            # x_s @ W_s + x_s @ W_m^2 = x_s @ A
    xm32 = x_m.astype(jnp.float32)
    xs32 = x_s.astype(jnp.float32)
    xm2 = xm32 * xm32                  # squared in f32 before any bf16 cast

    # ---- generation-aware tile selection ----
    vmem_cap = _vmem_capacity_bytes()
    budget = int(0.70 * vmem_cap)

    Bp0 = _round_up(B, 8)
    Fop0 = _round_up(Fout, 128)
    Fkp0 = _round_up(Fin, 128)         # pad the contraction dim too

    tb = _round_up(min(tile_b, Bp0), 8)
    tn = min(_round_up(tile_n, 128), Fop0)
    tk = Fkp0 if tile_k is None else min(_round_up(tile_k, 128), Fkp0)

    def vmem_est(tb_, tn_, tk_):
        # double-buffered x_m(tk)+xcat(2tk), W_m(tk)+Wcat(2tk), biases,
        # and the two resident f32 output tiles.
        return 2 * (3 * tb_ * tk_ * mm_sz
                    + 3 * tk_ * tn_ * mm_sz
                    + 2 * tn_ * 4
                    + 2 * tb_ * tn_ * 4)

    while vmem_est(tb, tn, tk) > budget:
        if tk > 128:
            tk = max(128, _round_up(tk // 2, 128))
        elif tn > 128:
            tn = max(128, _round_up(tn // 2, 128))
        elif tb > 8:
            tb = max(8, _round_up(tb // 2, 8))
        else:
            break

    # v7x has 2 TensorCores: avoid a degenerate (1,1,k) grid by splitting the
    # batch axis when possible (keeps per-core weight-block reuse).
    if Fop0 <= tn and Bp0 <= tb and Bp0 >= 16:
        tb = _round_up((Bp0 + 1) // 2, 8)

    Bp = _round_up(Bp0, tb)
    Fop = _round_up(Fop0, tn)
    Fkp = _round_up(Fkp0, tk)
    b_tiles = Bp // tb
    n_tiles = Fop // tn
    k_tiles = Fkp // tk

    # ---- padding (zero-padding K is numerically exact) ----
    def pad2(x, rows, cols):
        pr, pc = rows - x.shape[0], cols - x.shape[1]
        if pr or pc:
            x = jnp.pad(x, ((0, pr), (0, pc)))
        return x

    xm_p = pad2(xm32, Bp, Fkp).astype(mm_dt)
    xs_p = pad2(xs32, Bp, Fkp)
    xm2_p = pad2(xm2, Bp, Fkp)
    wm_p = pad2(W_m32, Fkp, Fop).astype(mm_dt)
    a_p = pad2(A, Fkp, Fop)
    ws_p = pad2(W_s, Fkp, Fop)

    # K-stack the sigma path: o_s = b_s + [x_s | x_m^2] @ [[A],[W_s]]
    xcat = jnp.concatenate([xs_p, xm2_p], axis=1).astype(mm_dt)
    wcat = jnp.concatenate([a_p, ws_p], axis=0).astype(mm_dt)

    bm_p = pad2(b_m.astype(jnp.float32).reshape(1, Fout), 1, Fop)
    bs_p = pad2(b_s.reshape(1, Fout), 1, Fop)

    # ---- grid-axis order: re-stream the cheaper operand ----
    act_bytes = 3 * Bp * Fkp * mm_sz        # x_m + xcat
    w_bytes = 3 * Fkp * Fop * mm_sz         # W_m + Wcat
    # order (n, b, k): weights resident along the inner batch axis
    # order (b, n, k): activations resident along the inner n axis
    if act_bytes + b_tiles * w_bytes < w_bytes + n_tiles * act_bytes:
        grid = (b_tiles, n_tiles, k_tiles)
        ib_of = lambda g0, g1: g0
        jn_of = lambda g0, g1: g1
    else:
        grid = (n_tiles, b_tiles, k_tiles)
        ib_of = lambda g0, g1: g1
        jn_of = lambda g0, g1: g0

    xm_spec = pl.BlockSpec((tb, tk), lambda g0, g1, k: (ib_of(g0, g1), k))
    xc_spec = pl.BlockSpec((tb, 2 * tk), lambda g0, g1, k: (ib_of(g0, g1), k))
    wm_spec = pl.BlockSpec((tk, tn), lambda g0, g1, k: (k, jn_of(g0, g1)))
    wc_spec = pl.BlockSpec((2 * tk, tn), lambda g0, g1, k: (k, jn_of(g0, g1)))
    bias_spec = pl.BlockSpec((1, tn), lambda g0, g1, k: (0, jn_of(g0, g1)))
    out_spec = pl.BlockSpec(
        (tb, tn), lambda g0, g1, k: (ib_of(g0, g1), jn_of(g0, g1)))

    est = vmem_est(tb, tn, tk)
    vmem_limit = int(min(max(est + (4 << 20), 16 << 20),
                         int(0.85 * vmem_cap)))

    o_m_p, o_s_p = pl.pallas_call(
        _npn_linear_kernel,
        out_shape=(
            jax.ShapeDtypeStruct((Bp, Fop), jnp.float32),
            jax.ShapeDtypeStruct((Bp, Fop), jnp.float32),
        ),
        grid_spec=pltpu.PrefetchScalarGridSpec(
            num_scalar_prefetch=0,
            grid=grid,
            in_specs=[xm_spec, xc_spec, wm_spec, wc_spec,
                      bias_spec, bias_spec],
            out_specs=[out_spec, out_spec],
        ),
        compiler_params=pltpu.CompilerParams(
            dimension_semantics=("parallel", "parallel", "arbitrary"),
            vmem_limit_bytes=vmem_limit),
    )(xm_p, xcat, wm_p, wcat, bm_p, bs_p)

    return o_m_p[:B, :Fout], o_s_p[:B, :Fout]


def init_params(key, in_features, out_features):
    """Deterministic re-implementation of GaussianNPNLinearLayer.__init__."""
    k1, k2 = jax.random.split(key)
    scale = np.sqrt(6.0) / np.sqrt(in_features + out_features)
    W_m = 2.0 * scale * (jax.random.uniform(k1, (in_features, out_features),
                                            jnp.float32) - 0.5)
    W_s = 1.0 * scale * jax.random.uniform(k2, (in_features, out_features),
                                           jnp.float32)
    M_s = jnp.log(jnp.exp(W_s) - 1.0)          # inverse-softplus
    b_m = jnp.zeros((out_features,), jnp.float32)
    p_s = jnp.exp(-1.0 * jnp.ones((out_features,), jnp.float32))
    return W_m, M_s, b_m, p_s


def reference(x_m, x_s, W_m, M_s, b_m, p_s):
    # Same (naive) formulation as the PyTorch module.
    W_s = jnp.log(1.0 + jnp.exp(M_s))
    b_s = jnp.log(1.0 + jnp.exp(p_s))
    o_m = b_m + x_m @ W_m
    o_s = b_s + x_s @ W_s + x_s @ (W_m ** 2) + (x_m ** 2) @ W_s
    return o_m, o_s


if __name__ == "__main__":
    key = jax.random.PRNGKey(0)

    # Small module-sized case; a padded multi-tile case (exercises batch/Fout
    # padding, the 2-TensorCore split and grid-order selection); a K-tiled
    # case (exercises the accumulation path over the "arbitrary" K axis).
    cases = [
        (8, 32, 32, {}),
        (136, 96, 160, {}),
        (64, 200, 96, {"tile_k": 128}),
    ]
    for idx, (batch, fin, fout, kw) in enumerate(cases):
        kp, kx, ks = jax.random.split(jax.random.fold_in(key, idx), 3)
        W_m, M_s, b_m, p_s = init_params(kp, fin, fout)

        x_m = jax.random.normal(kx, (batch, fin), jnp.float32)
        x_s = jax.random.uniform(ks, (batch, fin), jnp.float32) * 0.1  # var>=0

        o_m, o_s = gaussian_npn_linear(x_m, x_s, W_m, M_s, b_m, p_s, **kw)
        jax.block_until_ready((o_m, o_s))

        r_m, r_s = reference(x_m, x_s, W_m, M_s, b_m, p_s)
        np.testing.assert_allclose(np.asarray(o_m), np.asarray(r_m),
                                   rtol=1e-5, atol=1e-5)
        np.testing.assert_allclose(np.asarray(o_s), np.asarray(r_s),
                                   rtol=1e-5, atol=1e-5)

    # bf16 MXU-operand fast path (v6e/v7x): f32 accumulation, looser tol.
    W_m, M_s, b_m, p_s = init_params(jax.random.fold_in(key, 100), 64, 64)
    x_m = jax.random.normal(jax.random.fold_in(key, 101), (32, 64), jnp.float32)
    x_s = jax.random.uniform(jax.random.fold_in(key, 102), (32, 64),
                             jnp.float32) * 0.1
    o_m, o_s = gaussian_npn_linear(x_m, x_s, W_m, M_s, b_m, p_s,
                                   matmul_dtype=jnp.bfloat16)
    jax.block_until_ready((o_m, o_s))
    r_m, r_s = reference(x_m, x_s, W_m, M_s, b_m, p_s)
    np.testing.assert_allclose(np.asarray(o_m), np.asarray(r_m),
                               rtol=5e-2, atol=5e-2)
    np.testing.assert_allclose(np.asarray(o_s), np.asarray(r_s),
                               rtol=5e-2, atol=5e-2)

    print("KERNEL_OK")
</pallas_src>

<mosaic_0001>
module attributes {stable_mosaic.version = 11 : i64} {
  func.func @_npn_linear_kernel(%arg0: i32, %arg1: i32, %arg2: i32, %arg3: memref<8x128xf32, #tpu.memory_space<vmem>>, %arg4: memref<8x256xf32, #tpu.memory_space<vmem>>, %arg5: memref<128x128xf32, #tpu.memory_space<vmem>>, %arg6: memref<256x128xf32, #tpu.memory_space<vmem>>, %arg7: memref<1x128xf32, #tpu.memory_space<vmem>>, %arg8: memref<1x128xf32, #tpu.memory_space<vmem>>, %arg9: memref<8x128xf32, #tpu.memory_space<vmem>>, %arg10: memref<8x128xf32, #tpu.memory_space<vmem>>) attributes {dimension_semantics = [#tpu.dimension_semantics<parallel>, #tpu.dimension_semantics<parallel>, #tpu.dimension_semantics<arbitrary>], iteration_bounds = array<i64: 1, 1, 1>, scalar_prefetch = 0 : i64, scratch_operands = 0 : i64, tpu.core_type = #tpu.core_type<tc>, window_params = [{transform_indices = @transform_0, window_bounds = array<i64: 8, 128>}, {transform_indices = @transform_1, window_bounds = array<i64: 8, 256>}, {transform_indices = @transform_2, window_bounds = array<i64: 128, 128>}, {transform_indices = @transform_3, window_bounds = array<i64: 256, 128>}, {transform_indices = @transform_4, window_bounds = array<i64: 1, 128>}, {transform_indices = @transform_5, window_bounds = array<i64: 1, 128>}, {transform_indices = @transform_6, window_bounds = array<i64: 8, 128>}, {transform_indices = @transform_7, window_bounds = array<i64: 8, 128>}]} {
    %c0 = arith.constant 0 : index
    %c0_0 = arith.constant 0 : index
    %0 = vector.load %arg3[%c0, %c0_0] : memref<8x128xf32, #tpu.memory_space<vmem>>, vector<8x128xf32>
    %c0_1 = arith.constant 0 : index
    %c0_2 = arith.constant 0 : index
    %1 = vector.load %arg5[%c0_1, %c0_2] : memref<128x128xf32, #tpu.memory_space<vmem>>, vector<128x128xf32>
    %cst = arith.constant dense<0.000000e+00> : vector<8x128xf32>
    %2 = tpu.matmul %0, %1, %cst {dimension_numbers = #tpu.dot_dimension_numbers<[1], [0], [0], [1], [0, 0, 1, 1], [], []>} : vector<8x128xf32>, vector<128x128xf32>, vector<8x128xf32> -> vector<8x128xf32>
    %c0_3 = arith.constant 0 : index
    %c0_4 = arith.constant 0 : index
    %3 = vector.load %arg4[%c0_3, %c0_4] : memref<8x256xf32, #tpu.memory_space<vmem>>, vector<8x256xf32>
    %c0_5 = arith.constant 0 : index
    %c0_6 = arith.constant 0 : index
    %4 = vector.load %arg6[%c0_5, %c0_6] : memref<256x128xf32, #tpu.memory_space<vmem>>, vector<256x128xf32>
    %cst_7 = arith.constant dense<0.000000e+00> : vector<8x128xf32>
    %5 = tpu.matmul %3, %4, %cst_7 {dimension_numbers = #tpu.dot_dimension_numbers<[1], [0], [0], [1], [0, 0, 1, 1], [], []>} : vector<8x256xf32>, vector<256x128xf32>, vector<8x128xf32> -> vector<8x128xf32>
    %c0_i32 = arith.constant 0 : i32
    %6 = arith.cmpi eq, %arg2, %c0_i32 : i32
    %7 = arith.extui %6 : i1 to i32
    %c0_i32_8 = arith.constant 0 : i32
    %8 = arith.cmpi ne, %7, %c0_i32_8 : i32
    scf.if %8 {
      %c0_11 = arith.constant 0 : index
      %c0_12 = arith.constant 0 : index
      %12 = vector.load %arg7[%c0_11, %c0_12] : memref<1x128xf32, #tpu.memory_space<vmem>>, vector<1x128xf32>
      %13 = vector.broadcast %12 : vector<1x128xf32> to vector<8x128xf32>
      %14 = arith.addf %13, %2 : vector<8x128xf32>
      %c0_13 = arith.constant 0 : index
      %c0_14 = arith.constant 0 : index
      %15 = vector.load %arg9[%c0_13, %c0_14] : memref<8x128xf32, #tpu.memory_space<vmem>>, vector<8x128xf32>
      tpu.vector_store %arg9[%c0_13, %c0_14], %14 {strides = array<i32>} : memref<8x128xf32, #tpu.memory_space<vmem>>, vector<8x128xf32>,
      %c0_15 = arith.constant 0 : index
      %c0_16 = arith.constant 0 : index
      %16 = vector.load %arg8[%c0_15, %c0_16] : memref<1x128xf32, #tpu.memory_space<vmem>>, vector<1x128xf32>
      %17 = vector.broadcast %16 : vector<1x128xf32> to vector<8x128xf32>
      %18 = arith.addf %17, %5 : vector<8x128xf32>
      %c0_17 = arith.constant 0 : index
      %c0_18 = arith.constant 0 : index
      %19 = vector.load %arg10[%c0_17, %c0_18] : memref<8x128xf32, #tpu.memory_space<vmem>>, vector<8x128xf32>
      tpu.vector_store %arg10[%c0_17, %c0_18], %18 {strides = array<i32>} : memref<8x128xf32, #tpu.memory_space<vmem>>, vector<8x128xf32>,
    } else {
    }
    %c0_i32_9 = arith.constant 0 : i32
    %9 = arith.cmpi ne, %arg2, %c0_i32_9 : i32
    %10 = arith.extui %9 : i1 to i32
    %c0_i32_10 = arith.constant 0 : i32
    %11 = arith.cmpi ne, %10, %c0_i32_10 : i32
    scf.if %11 {
      %c0_11 = arith.constant 0 : index
      %c0_12 = arith.constant 0 : index
      %12 = vector.load %arg9[%c0_11, %c0_12] : memref<8x128xf32, #tpu.memory_space<vmem>>, vector<8x128xf32>
      %13 = arith.addf %12, %2 : vector<8x128xf32>
      %c0_13 = arith.constant 0 : index
      %c0_14 = arith.constant 0 : index
      %14 = vector.load %arg9[%c0_13, %c0_14] : memref<8x128xf32, #tpu.memory_space<vmem>>, vector<8x128xf32>
      tpu.vector_store %arg9[%c0_13, %c0_14], %13 {strides = array<i32>} : memref<8x128xf32, #tpu.memory_space<vmem>>, vector<8x128xf32>,
      %c0_15 = arith.constant 0 : index
      %c0_16 = arith.constant 0 : index
      %15 = vector.load %arg10[%c0_15, %c0_16] : memref<8x128xf32, #tpu.memory_space<vmem>>, vector<8x128xf32>
      %16 = arith.addf %15, %5 : vector<8x128xf32>
      %c0_17 = arith.constant 0 : index
      %c0_18 = arith.constant 0 : index
      %17 = vector.load %arg10[%c0_17, %c0_18] : memref<8x128xf32, #tpu.memory_space<vmem>>, vector<8x128xf32>
      tpu.vector_store %arg10[%c0_17, %c0_18], %16 {strides = array<i32>} : memref<8x128xf32, #tpu.memory_space<vmem>>, vector<8x128xf32>,
    } else {
    }
    return
  }
  func.func @transform_0(%arg0: i32, %arg1: i32, %arg2: i32) -> (i32, i32) {
    %c0_i32 = arith.constant 0 : i32
    return %arg1, %arg2 : i32, i32
  }
  func.func @transform_1(%arg0: i32, %arg1: i32, %arg2: i32) -> (i32, i32) {
    %c0_i32 = arith.constant 0 : i32
    return %arg1, %arg2 : i32, i32
  }
  func.func @transform_2(%arg0: i32, %arg1: i32, %arg2: i32) -> (i32, i32) {
    %c0_i32 = arith.constant 0 : i32
    return %arg2, %arg0 : i32, i32
  }
  func.func @transform_3(%arg0: i32, %arg1: i32, %arg2: i32) -> (i32, i32) {
    %c0_i32 = arith.constant 0 : i32
    return %arg2, %arg0 : i32, i32
  }
  func.func @transform_4(%arg0: i32, %arg1: i32, %arg2: i32) -> (i32, i32) {
    %c0_i32 = arith.constant 0 : i32
    %c0_i32_0 = arith.constant 0 : i32
    return %c0_i32, %arg0 : i32, i32
  }
  func.func @transform_5(%arg0: i32, %arg1: i32, %arg2: i32) -> (i32, i32) {
    %c0_i32 = arith.constant 0 : i32
    %c0_i32_0 = arith.constant 0 : i32
    return %c0_i32, %arg0 : i32, i32
  }
  func.func @transform_6(%arg0: i32, %arg1: i32, %arg2: i32) -> (i32, i32) {
    %c0_i32 = arith.constant 0 : i32
    return %arg1, %arg0 : i32, i32
  }
  func.func @transform_7(%arg0: i32, %arg1: i32, %arg2: i32) -> (i32, i32) {
    %c0_i32 = arith.constant 0 : i32
    return %arg1, %arg0 : i32, i32
  }
}

</mosaic_0001>

<llo_original>
// kernel: mul.3
$region0: #{mul.3}
  #allocation0 [shape = 's32[1]{0}', space=sflag, size = 0x4, scoped, tag = 'scoped memory for mul.3']
  %s0 = inlined_call_operand.vmem [shape: f32[8,32], index: 0, kind: input, shape index: {}, may-alias: {0,1}]
  %s1 = inlined_call_operand.vmem [shape: f32[8,32], index: 1, kind: input, shape index: {}, may-alias: {0,1}]
  %s2 = inlined_call_operand.vmem [shape: f32[8,32], index: 2, kind: output, shape index: {}]
  %v3 = vld [vmem:[%s0] sm:$0xff]
  %v4 = vld [vmem:[%s1] sm:$0xff]
  %5 = xla_tuple %v3, %v4
  %6 = xla_tuple %5
  %v7 = vmul.f32 %v3, %v4
  %8 = xla_tuple %v7
  %9 = vst [vmem:[%s2] sm:$0xff] %v7

// kernel: gaussian_npn_linear.1
$region0: #{gaussian_npn_linear.1}
  #allocation0 [shape = 'u32[]', space=smem, size = 0x4, offset = 0x4, fixed_abs, tag = 'smem constant byte address 0x4 - core index']
  #allocation1 [shape = 'u32[144,128]{1,0:T(1,128)}', space=vmem, size = 0x12000, scoped, tag = 'internal scratch']
  %s0 = inlined_call_operand.vmem [shape: f32[8,128], index: 0, kind: input, shape index: {}]
  %s1 = inlined_call_operand.vmem [shape: f32[8,256], index: 1, kind: input, shape index: {}]
  %s2 = inlined_call_operand.vmem [shape: f32[128,128], index: 2, kind: input, shape index: {}]
  %s3 = inlined_call_operand.vmem [shape: f32[256,128], index: 3, kind: input, shape index: {}]
  %s4 = inlined_call_operand.vmem [shape: f32[1,128], index: 4, kind: input, shape index: {}]
  %s5 = inlined_call_operand.vmem [shape: f32[1,128], index: 5, kind: input, shape index: {}]
  %s6 = inlined_call_operand.hbm [shape: f32[8,128], index: 6, kind: output, shape index: {0}]
  %s7 = inlined_call_operand.hbm [shape: f32[8,128], index: 7, kind: output, shape index: {1}]
  %8 = xla_tuple %s6, %s7
  %s9 = sld [smem:[#allocation0]]
  $region50: #{gaussian_npn_linear.1} parent=0
    _
  %s11 = ssub.s32 1, %s9
  %s12 = scalar_select 0, %s11, %s9
  $region1: #{gaussian_npn_linear.1} parent=0
    #allocation2 [shape = 'u8[4096]{0}', space=vmem, size = 0x1000, scoped, tag = 'output window, operand 0, single buffered']
    #allocation3 [shape = 's32[1]{0}', space=sflag, size = 0x4, scoped, tag = 'scoped memory for gaussian_npn_linear.1']
    #allocation4 [shape = 'u8[4096]{0}', space=vmem, size = 0x1000, scoped, tag = 'output window, operand 1, single buffered']
    #allocation5 [shape = 's32[1]{0}', space=sflag, size = 0x4, scoped, tag = 'scoped memory for gaussian_npn_linear.1']
    %13 = vsyncpa [#allocation3], 0
    %14 = vsyncpa [#allocation5], 0
    // Predicated region
    $region2: #{gaussian_npn_linear.1} parent=1 // pred_check
      _
    $region3: #{gaussian_npn_linear.1} parent=1 // pred_check_branch
      %16 = sbr.rel (0) target = $region5
    $region4: #{gaussian_npn_linear.1} parent=1 // pred_region
      _
    $region5: #{gaussian_npn_linear.1} parent=1 // pred_fallthru
      _
    // Predicated region
    $region6: #{gaussian_npn_linear.1} parent=1 // pred_check
      _
    $region7: #{gaussian_npn_linear.1} parent=1 // pred_check_branch
      %18 = sbr.rel (0) target = $region9
    $region8: #{gaussian_npn_linear.1} parent=1 // pred_region
      _
    $region9: #{gaussian_npn_linear.1} parent=1 // pred_fallthru
      _
    // Predicated region
    $region10: #{gaussian_npn_linear.1} parent=1 // pred_check
      _
    $region11: #{gaussian_npn_linear.1} parent=1 // pred_check_branch
      %20 = sbr.rel (0) target = $region13
    $region12: #{gaussian_npn_linear.1} parent=1 // pred_region
      _
    $region13: #{gaussian_npn_linear.1} parent=1 // pred_fallthru
      _
    // Predicated region
    $region14: #{gaussian_npn_linear.1} parent=1 // pred_check
      _
    $region15: #{gaussian_npn_linear.1} parent=1 // pred_check_branch
      %22 = sbr.rel (0) target = $region17
    $region16: #{gaussian_npn_linear.1} parent=1 // pred_region
      _
    $region17: #{gaussian_npn_linear.1} parent=1 // pred_fallthru
      _
    // Predicated region
    $region18: #{gaussian_npn_linear.1} parent=1 // pred_check
      _
    $region19: #{gaussian_npn_linear.1} parent=1 // pred_check_branch
      %24 = sbr.rel (0) target = $region21
    $region20: #{gaussian_npn_linear.1} parent=1 // pred_region
      _
    $region21: #{gaussian_npn_linear.1} parent=1 // pred_fallthru
      _
    // Predicated region
    $region22: #{gaussian_npn_linear.1} parent=1 // pred_check
      _
    $region23: #{gaussian_npn_linear.1} parent=1 // pred_check_branch
      %26 = sbr.rel (0) target = $region25
    $region24: #{gaussian_npn_linear.1} parent=1 // pred_region
      _
    $region25: #{gaussian_npn_linear.1} parent=1 // pred_fallthru
      _
    %v27 = vld [vmem:[%s0] sm:$0xff]
    %v28 = vld [vmem:[%s2] sm:$0xff]
    %v29 = vld [vmem:[%s2 + $0x8] sm:$0xff]
    %v30 = vld [vmem:[%s2 + $0x10] sm:$0xff]
    %v31 = vld [vmem:[%s2 + $0x18] sm:$0xff]
    %v32 = vld [vmem:[%s2 + $0x20] sm:$0xff]
    %v33 = vld [vmem:[%s2 + $0x28] sm:$0xff]
    %v34 = vld [vmem:[%s2 + $0x30] sm:$0xff]
    %v35 = vld [vmem:[%s2 + $0x38] sm:$0xff]
    %v36 = vld [vmem:[%s2 + $0x40] sm:$0xff]
    %v37 = vld [vmem:[%s2 + $0x48] sm:$0xff]
    %v38 = vld [vmem:[%s2 + $0x50] sm:$0xff]
    %v39 = vld [vmem:[%s2 + $0x58] sm:$0xff]
    %v40 = vld [vmem:[%s2 + $0x60] sm:$0xff]
    %v41 = vld [vmem:[%s2 + $0x68] sm:$0xff]
    %v42 = vld [vmem:[%s2 + $0x70] sm:$0xff]
    %v43 = vld [vmem:[%s2 + $0x78] sm:$0xff]
    %44 = vmatprep.subr.mxu0 0.0
    %45 = vmatpush1.msra.mxu0 %v43
    %46 = vmatprep.subr.mxu0 0.0
    %47 = vmatpush1.msra.mxu0 %v42
    %48 = vmatprep.subr.mxu0 0.0
    %49 = vmatpush1.msra.mxu0 %v41
    %50 = vmatprep.subr.mxu0 0.0
    %51 = vmatpush1.msra.mxu0 %v40
    %52 = vmatprep.subr.mxu0 0.0
    %53 = vmatpush1.msra.mxu0 %v39
    %54 = vmatprep.subr.mxu0 0.0
    %55 = vmatpush1.msra.mxu0 %v38
    %56 = vmatprep.subr.mxu0 0.0
    %57 = vmatpush1.msra.mxu0 %v37
    %58 = vmatprep.subr.mxu0 0.0
    %59 = vmatpush1.msra.mxu0 %v36
    %60 = vmatprep.subr.mxu0 0.0
    %61 = vmatpush1.msra.mxu0 %v35
    %62 = vmatprep.subr.mxu0 0.0
    %63 = vmatpush1.msra.mxu0 %v34
    %64 = vmatprep.subr.mxu0 0.0
    %65 = vmatpush1.msra.mxu0 %v33
    %66 = vmatprep.subr.mxu0 0.0
    %67 = vmatpush1.msra.mxu0 %v32
    %68 = vmatprep.subr.mxu0 0.0
    %69 = vmatpush1.msra.mxu0 %v31
    %70 = vmatprep.subr.mxu0 0.0
    %71 = vmatpush1.msra.mxu0 %v30
    %72 = vmatprep.subr.mxu0 0.0
    %73 = vmatpush1.msra.mxu0 %v29
    %74 = vmatprep.subr.mxu0 0.0
    %75 = vmatpush1.msra.mxu0 %v28
    %76 = vmatprep.subr.mxu0 0.0
    %77 = vmatpush2.msra.mxu0 0.0
    %78 = vmatprep.subr.mxu0 0.0
    %79 = vmatpush2.msra.mxu0 0.0
    %80 = vmatprep.subr.mxu0 0.0
    %81 = vmatpush2.msra.mxu0 0.0
    %82 = vmatprep.subr.mxu0 0.0
    %83 = vmatpush2.msra.mxu0 0.0
    %84 = vmatprep.subr.mxu0 0.0
    %85 = vmatpush2.msra.mxu0 0.0
    %86 = vmatprep.subr.mxu0 0.0
    %87 = vmatpush2.msra.mxu0 0.0
    %88 = vmatprep.subr.mxu0 0.0
    %89 = vmatpush2.msra.mxu0 0.0
    %90 = vmatprep.subr.mxu0 0.0
    %91 = vmatpush2.msra.mxu0 0.0
    %92 = vmatprep.subr.mxu0 0.0
    %93 = vmatpush2.msra.mxu0 0.0
    %94 = vmatprep.subr.mxu0 0.0
    %95 = vmatpush2.msra.mxu0 0.0
    %96 = vmatprep.subr.mxu0 0.0
    %97 = vmatpush2.msra.mxu0 0.0
    %98 = vmatprep.subr.mxu0 0.0
    %99 = vmatpush2.msra.mxu0 0.0
    %100 = vmatprep.subr.mxu0 0.0
    %101 = vmatpush2.msra.mxu0 0.0
    %102 = vmatprep.subr.mxu0 0.0
    %103 = vmatpush2.msra.mxu0 0.0
    %104 = vmatprep.subr.mxu0 0.0
    %105 = vmatpush2.msra.mxu0 0.0
    %106 = vmatprep.subr.mxu0 0.0
    %107 = vmatpush2.msra.mxu0 0.0
    %108 = vmatprep.mubr.f32.mxu0 0.0
    %109 = vmatmul.mubr.f32.gmra.mxu0 %v27
    %v110 = vpop.f32.mrf.mxu0
    %v111 = vadd.f32 0.0, %v110
    %v112 = vpop.f32.mrf.mxu0
    %113 = vdwg.mxu0
    %v114 = vld [vmem:[%s1] sm:$0xff]
    %v115 = vld [vmem:[%s1 + $0x8] sm:$0xff]
    %v116 = vld [vmem:[%s3] sm:$0xff]
    %v117 = vld [vmem:[%s3 + $0x8] sm:$0xff]
    %v118 = vld [vmem:[%s3 + $0x10] sm:$0xff]
    %v119 = vld [vmem:[%s3 + $0x18] sm:$0xff]
    %v120 = vld [vmem:[%s3 + $0x20] sm:$0xff]
    %v121 = vld [vmem:[%s3 + $0x28] sm:$0xff]
    %v122 = vld [vmem:[%s3 + $0x30] sm:$0xff]
    %v123 = vld [vmem:[%s3 + $0x38] sm:$0xff]
    %v124 = vld [vmem:[%s3 + $0x40] sm:$0xff]
    %v125 = vld [vmem:[%s3 + $0x48] sm:$0xff]
    %v126 = vld [vmem:[%s3 + $0x50] sm:$0xff]
    %v127 = vld [vmem:[%s3 + $0x58] sm:$0xff]
    %v128 = vld [vmem:[%s3 + $0x60] sm:$0xff]
    %v129 = vld [vmem:[%s3 + $0x68] sm:$0xff]
    %v130 = vld [vmem:[%s3 + $0x70] sm:$0xff]
    %v131 = vld [vmem:[%s3 + $0x78] sm:$0xff]
    %v132 = vld [vmem:[%s3 + $0x80] sm:$0xff]
    %v133 = vld [vmem:[%s3 + $0x88] sm:$0xff]
    %v134 = vld [vmem:[%s3 + $0x90] sm:$0xff]
    %v135 = vld [vmem:[%s3 + $0x98] sm:$0xff]
    %v136 = vld [vmem:[%s3 + $0xa0] sm:$0xff]
    %v137 = vld [vmem:[%s3 + $0xa8] sm:$0xff]
    %v138 = vld [vmem:[%s3 + $0xb0] sm:$0xff]
    %v139 = vld [vmem:[%s3 + $0xb8] sm:$0xff]
    %v140 = vld [vmem:[%s3 + $0xc0] sm:$0xff]
    %v141 = vld [vmem:[%s3 + $0xc8] sm:$0xff]
    %v142 = vld [vmem:[%s3 + $0xd0] sm:$0xff]
    %v143 = vld [vmem:[%s3 + $0xd8] sm:$0xff]
    %v144 = vld [vmem:[%s3 + $0xe0] sm:$0xff]
    %v145 = vld [vmem:[%s3 + $0xe8] sm:$0xff]
    %v146 = vld [vmem:[%s3 + $0xf0] sm:$0xff]
    %v147 = vld [vmem:[%s3 + $0xf8] sm:$0xff]
    %148 = vmatprep.subr.mxu0 0.0
    %149 = vmatpush1.msra.mxu0 %v131
    %150 = vmatprep.subr.mxu0 0.0
    %151 = vmatpush1.msra.mxu0 %v130
    %152 = vmatprep.subr.mxu0 0.0
    %153 = vmatpush1.msra.mxu0 %v129
    %154 = vmatprep.subr.mxu0 0.0
    %155 = vmatpush1.msra.mxu0 %v128
    %156 = vmatprep.subr.mxu0 0.0
    %157 = vmatpush1.msra.mxu0 %v127
    %158 = vmatprep.subr.mxu0 0.0
    %159 = vmatpush1.msra.mxu0 %v126
    %160 = vmatprep.subr.mxu0 0.0
    %161 = vmatpush1.msra.mxu0 %v125
    %162 = vmatprep.subr.mxu0 0.0
    %163 = vmatpush1.msra.mxu0 %v124
    %164 = vmatprep.subr.mxu0 0.0
    %165 = vmatpush1.msra.mxu0 %v123
    %166 = vmatprep.subr.mxu0 0.0
    %167 = vmatpush1.msra.mxu0 %v122
    %168 = vmatprep.subr.mxu0 0.0
    %169 = vmatpush1.msra.mxu0 %v121
    %170 = vmatprep.subr.mxu0 0.0
    %171 = vmatpush1.msra.mxu0 %v120
    %172 = vmatprep.subr.mxu0 0.0
    %173 = vmatpush1.msra.mxu0 %v119
    %174 = vmatprep.subr.mxu0 0.0
    %175 = vmatpush1.msra.mxu0 %v118
    %176 = vmatprep.subr.mxu0 0.0
    %177 = vmatpush1.msra.mxu0 %v117
    %178 = vmatprep.subr.mxu0 0.0
    %179 = vmatpush1.msra.mxu0 %v116
    %180 = vmatprep.subr.mxu0 0.0
    %181 = vmatpush2.msra.mxu0 %v147
    %182 = vmatprep.subr.mxu0 0.0
    %183 = vmatpush2.msra.mxu0 %v146
    %184 = vmatprep.subr.mxu0 0.0
    %185 = vmatpush2.msra.mxu0 %v145
    %186 = vmatprep.subr.mxu0 0.0
    %187 = vmatpush2.msra.mxu0 %v144
    %188 = vmatprep.subr.mxu0 0.0
    %189 = vmatpush2.msra.mxu0 %v143
    %190 = vmatprep.subr.mxu0 0.0
    %191 = vmatpush2.msra.mxu0 %v142
    %192 = vmatprep.subr.mxu0 0.0
    %193 = vmatpush2.msra.mxu0 %v141
    %194 = vmatprep.subr.mxu0 0.0
    %195 = vmatpush2.msra.mxu0 %v140
    %196 = vmatprep.subr.mxu0 0.0
    %197 = vmatpush2.msra.mxu0 %v139
    %198 = vmatprep.subr.mxu0 0.0
    %199 = vmatpush2.msra.mxu0 %v138
    %200 = vmatprep.subr.mxu0 0.0
    %201 = vmatpush2.msra.mxu0 %v137
    %202 = vmatprep.subr.mxu0 0.0
    %203 = vmatpush2.msra.mxu0 %v136
    %204 = vmatprep.subr.mxu0 0.0
    %205 = vmatpush2.msra.mxu0 %v135
    %206 = vmatprep.subr.mxu0 0.0
    %207 = vmatpush2.msra.mxu0 %v134
    %208 = vmatprep.subr.mxu0 0.0
    %209 = vmatpush2.msra.mxu0 %v133
    %210 = vmatprep.subr.mxu0 0.0
    %211 = vmatpush2.msra.mxu0 %v132
    %212 = vmatprep.mubr.f32.mxu0 %v115
    %213 = vmatmul.mubr.f32.gmra.mxu0 %v114
    %v214 = vpop.f32.mrf.mxu0
    %v215 = vadd.f32 0.0, %v214
    %v216 = vpop.f32.mrf.mxu0
    %217 = vdwg.mxu0
    %p218 = scmp.eq.s32.totalorder 0, 0
    // Predicated region
    $region26: #{gaussian_npn_linear.1} parent=1 // pred_check
      %p219 = pneg %p218
    $region27: #{gaussian_npn_linear.1} parent=1 // pred_check_branch
      %221 = sbr.rel (%p219) target = $region29
    $region28: #{gaussian_npn_linear.1} parent=1 // pred_region
      %v222 = vld [vmem:[%s4] sm:$0x1]
      %v224 = vlaneseq
      %v225 = vshrl.u32 %v224, 7
      %v226 = vsub.s32 0, %v225
      %v227 = vrot.slane %v222, %v226
      %v229 = vadd.f32 %v227, %v111
      %230 = vst [vmem:[#allocation2] sm:$0xff] %v229
      %v231 = vld [vmem:[%s5] sm:$0x1]
      %v233 = vlaneseq
      %v234 = vshrl.u32 %v233, 7
      %v235 = vsub.s32 0, %v234
      %v236 = vrot.slane %v231, %v235
      %v238 = vadd.f32 %v236, %v215
      %239 = vst [vmem:[#allocation4] sm:$0xff] %v238
    $region29: #{gaussian_npn_linear.1} parent=1 // pred_fallthru
      _
    %p240 = scmp.ne.s32.totalorder 0, 0
    // Predicated region
    $region30: #{gaussian_npn_linear.1} parent=1 // pred_check
      %p241 = pneg %p240
    $region31: #{gaussian_npn_linear.1} parent=1 // pred_check_branch
      %243 = sbr.rel (%p241) target = $region33
    $region32: #{gaussian_npn_linear.1} parent=1 // pred_region
      %v244 = vld [vmem:[#allocation2] sm:$0xff]
      %v245 = vadd.f32 %v244, %v111
      %246 = vst [vmem:[#allocation2] sm:$0xff] %v245
      %v247 = vld [vmem:[#allocation4] sm:$0xff]
      %v248 = vadd.f32 %v247, %v215
      %249 = vst [vmem:[#allocation4] sm:$0xff] %v248
    $region33: #{gaussian_npn_linear.1} parent=1 // pred_fallthru
      _
    // Predicated region
    $region34: #{gaussian_npn_linear.1} parent=1 // pred_check
      _
    $region35: #{gaussian_npn_linear.1} parent=1 // pred_check_branch
      %251 = sbr.rel (0) target = $region37
    $region36: #{gaussian_npn_linear.1} parent=1 // pred_region
      %s253 = ssub.s32 128, 128
      %254 = vsyncadd [#allocation3], %s253
      %s256 = sshll.u32 [#allocation2], 4
      %s257 = int_to_ptr.vmem [resolvable:$true] %s256
      %259 = dma.vmem_to_hbm [thread:$0]  %s257, 128, %s6, [#allocation3]
    $region37: #{gaussian_npn_linear.1} parent=1 // pred_fallthru
      _
    // Predicated region
    $region38: #{gaussian_npn_linear.1} parent=1 // pred_check
      _
    $region39: #{gaussian_npn_linear.1} parent=1 // pred_check_branch
      %261 = sbr.rel (0) target = $region41
    $region40: #{gaussian_npn_linear.1} parent=1 // pred_region
      %s263 = ssub.s32 128, 128
      %264 = vsyncadd [#allocation5], %s263
      %s266 = sshll.u32 [#allocation4], 4
      %s267 = int_to_ptr.vmem [resolvable:$true] %s266
      %269 = dma.vmem_to_hbm [thread:$0]  %s267, 128, %s7, [#allocation5]
    $region41: #{gaussian_npn_linear.1} parent=1 // pred_fallthru
      _
    // Predicated region
    $region42: #{gaussian_npn_linear.1} parent=1 // pred_check
      _
    $region43: #{gaussian_npn_linear.1} parent=1 // pred_check_branch
      %271 = sbr.rel (0) target = $region45
    $region44: #{gaussian_npn_linear.1} parent=1 // pred_region
      %272 = dma.done [#allocation3], 128
    $region45: #{gaussian_npn_linear.1} parent=1 // pred_fallthru
      _
    // Predicated region
    $region46: #{gaussian_npn_linear.1} parent=1 // pred_check
      _
    $region47: #{gaussian_npn_linear.1} parent=1 // pred_check_branch
      %274 = sbr.rel (0) target = $region49
    $region48: #{gaussian_npn_linear.1} parent=1 // pred_region
      %275 = dma.done [#allocation5], 128
    $region49: #{gaussian_npn_linear.1} parent=1 // pred_fallthru
      _
    %276 = vsyncpa [#allocation3], 1
    %277 = vsyncpa [#allocation5], 1

</llo_original>
